<compile_context>
chip_gen: v6e
topology: v6e:2x2x1
jax: 0.10.0
libtpu: 0.0.40
codegen_flags: <defaults>
</compile_context>

<pallas_src>
import jax
import jax.numpy as jnp
from jax.experimental import pallas as pl
from jax.experimental.pallas import tpu as pltpu


def fused_linear_kernel(xt_ref, w_ref, b_ref, o_ref):
    # y.T = W @ x.T + b  -> (out, TB): lane-dense output, no in-kernel transpose.
    o_ref[...] = (
        jnp.dot(w_ref[...], xt_ref[...], preferred_element_type=jnp.float32)
        + b_ref[...]
    ).astype(o_ref.dtype)


def mlp_forward(x, w1, b1, w2, b2, *, tb=8192):
    """Forward of Linear(in->hidden) -> Linear(hidden->out), torch layouts.

    x: (B, in); w1: (hidden, in); b1: (hidden,); w2: (out, hidden); b2: (out,).
    Returns (B, out), identical to layer2(layer1(x)).
    """
    x = jnp.asarray(x, jnp.float32)
    w1 = jnp.asarray(w1, jnp.float32)
    b1 = jnp.asarray(b1, jnp.float32)
    w2 = jnp.asarray(w2, jnp.float32)
    b2 = jnp.asarray(b2, jnp.float32)

    # Exact algebraic fusion of the two linears (no nonlinearity in between).
    w = jnp.dot(w2, w1)                         # (out, in)
    b = (jnp.dot(w2, b1) + b2).reshape(-1, 1)   # (out, 1) column bias

    in_size, out_size = w.shape[1], w.shape[0]
    B = x.shape[0]

    xt = x.T                                    # (in, B): batch on lanes
    tb = min(tb, B)                             # tile the batch (lane) axis
    grid = (pl.cdiv(B, tb),)

    yT = pl.pallas_call(
        fused_linear_kernel,
        out_shape=jax.ShapeDtypeStruct((out_size, B), jnp.float32),
        grid_spec=pltpu.PrefetchScalarGridSpec(
            num_scalar_prefetch=0,
            grid=grid,
            in_specs=[
                # Batch-tiled x.T; first dim is the full (tiny) feature dim.
                pl.BlockSpec((in_size, tb), lambda i: (0, i)),
                # Fused weight / bias: same block every step -> VMEM resident.
                pl.BlockSpec(w.shape, lambda i: (0, 0)),
                pl.BlockSpec(b.shape, lambda i: (0, 0)),
            ],
            out_specs=pl.BlockSpec((out_size, tb), lambda i: (0, i)),
        ),
        compiler_params=pltpu.CompilerParams(
            # Batch tiles are independent -> megacore-shardable on v7x.
            dimension_semantics=("parallel",),
            # Sized against v7x's 64 MiB physical VMEM so the same settings
            # work on v5e / v6e / v7x without a per-generation fork.
            vmem_limit_bytes=32 * 1024 * 1024,
        ),
    )(xt, w, b)

    return yT.T                                 # back to (B, out)


if __name__ == "__main__":
    # TorchModel(input_size=3, hidden_size=5, output_size=2)
    input_size, hidden_size, output_size = 3, 5, 2

    key = jax.random.PRNGKey(0)
    k_w1, k_b1, k_w2, k_b2 = jax.random.split(key, 4)

    # Deterministic parameter init (uniform, same bounds as nn.Linear default).
    bound1 = 1.0 / (input_size ** 0.5)
    bound2 = 1.0 / (hidden_size ** 0.5)
    w1 = jax.random.uniform(k_w1, (hidden_size, input_size), jnp.float32,
                            -bound1, bound1)    # torch layout (out, in)
    b1 = jax.random.uniform(k_b1, (hidden_size,), jnp.float32, -bound1, bound1)
    w2 = jax.random.uniform(k_w2, (output_size, hidden_size), jnp.float32,
                            -bound2, bound2)
    b2 = jax.random.uniform(k_b2, (output_size,), jnp.float32, -bound2, bound2)

    # Example input matching the module's usage: (batch=2, input_size=3)
    x = jnp.array([[3.1, 1.3, 1.2],
                   [2.1, 1.3, 13.0]], dtype=jnp.float32)

    y = mlp_forward(x, w1, b1, w2, b2)
    y = jax.block_until_ready(y)

    # Pure-JAX reference: the UN-fused two-layer form, i.e. exactly
    # TorchModel.forward / MyModel.forward semantics.
    h_ref = x @ w1.T + b1
    y_ref = h_ref @ w2.T + b2
    assert y.shape == y_ref.shape, (y.shape, y_ref.shape)
    assert jnp.allclose(y, y_ref, atol=1e-5, rtol=1e-5), (y, y_ref)

    print("KERNEL_OK")
</pallas_src>

<mosaic_0001>
module attributes {stable_mosaic.version = 11 : i64} {
  func.func @fused_linear_kernel(%arg0: i32, %arg1: memref<3x2xf32, #tpu.memory_space<vmem>>, %arg2: memref<2x3xf32, #tpu.memory_space<vmem>>, %arg3: memref<2x1xf32, #tpu.memory_space<vmem>>, %arg4: memref<2x2xf32, #tpu.memory_space<vmem>>) attributes {dimension_semantics = [#tpu.dimension_semantics<parallel>], iteration_bounds = array<i64: 1>, scalar_prefetch = 0 : i64, scratch_operands = 0 : i64, tpu.core_type = #tpu.core_type<tc>, window_params = [{transform_indices = @transform_0, window_bounds = array<i64: 3, 2>}, {pipeline_mode = #tpu.pipeline_mode<synchronous>, transform_indices = @transform_1, window_bounds = array<i64: 2, 3>}, {pipeline_mode = #tpu.pipeline_mode<synchronous>, transform_indices = @transform_2, window_bounds = array<i64: 2, 1>}, {transform_indices = @transform_3, window_bounds = array<i64: 2, 2>}]} {
    %c0 = arith.constant 0 : index
    %c0_0 = arith.constant 0 : index
    %0 = vector.load %arg2[%c0, %c0_0] : memref<2x3xf32, #tpu.memory_space<vmem>>, vector<2x3xf32>
    %c0_1 = arith.constant 0 : index
    %c0_2 = arith.constant 0 : index
    %1 = vector.load %arg1[%c0_1, %c0_2] : memref<3x2xf32, #tpu.memory_space<vmem>>, vector<3x2xf32>
    %cst = arith.constant dense<0.000000e+00> : vector<2x2xf32>
    %2 = tpu.matmul %0, %1, %cst {dimension_numbers = #tpu.dot_dimension_numbers<[1], [0], [0], [1], [0, 0, 1, 1], [], []>} : vector<2x3xf32>, vector<3x2xf32>, vector<2x2xf32> -> vector<2x2xf32>
    %c0_3 = arith.constant 0 : index
    %c0_4 = arith.constant 0 : index
    %3 = vector.load %arg3[%c0_3, %c0_4] : memref<2x1xf32, #tpu.memory_space<vmem>>, vector<2x1xf32>
    %4 = vector.broadcast %3 : vector<2x1xf32> to vector<2x2xf32>
    %5 = arith.addf %2, %4 : vector<2x2xf32>
    %c0_5 = arith.constant 0 : index
    %c0_6 = arith.constant 0 : index
    %6 = vector.load %arg4[%c0_5, %c0_6] : memref<2x2xf32, #tpu.memory_space<vmem>>, vector<2x2xf32>
    tpu.vector_store %arg4[%c0_5, %c0_6], %5 {strides = array<i32>} : memref<2x2xf32, #tpu.memory_space<vmem>>, vector<2x2xf32>,
    return
  }
  func.func @transform_0(%arg0: i32) -> (i32, i32) {
    %c0_i32 = arith.constant 0 : i32
    %c0_i32_0 = arith.constant 0 : i32
    return %c0_i32, %arg0 : i32, i32
  }
  func.func @transform_1(%arg0: i32) -> (i32, i32) {
    %c0_i32 = arith.constant 0 : i32
    %c0_i32_0 = arith.constant 0 : i32
    %c0_i32_1 = arith.constant 0 : i32
    return %c0_i32, %c0_i32_0 : i32, i32
  }
  func.func @transform_2(%arg0: i32) -> (i32, i32) {
    %c0_i32 = arith.constant 0 : i32
    %c0_i32_0 = arith.constant 0 : i32
    %c0_i32_1 = arith.constant 0 : i32
    return %c0_i32, %c0_i32_0 : i32, i32
  }
  func.func @transform_3(%arg0: i32) -> (i32, i32) {
    %c0_i32 = arith.constant 0 : i32
    %c0_i32_0 = arith.constant 0 : i32
    return %c0_i32, %arg0 : i32, i32
  }
}

</mosaic_0001>

<llo_original>
// kernel: tpu_custom_call.1
$region0: #{tpu_custom_call.1}
  #allocation0 [shape = 'u32[]', space=smem, size = 0x4, offset = 0x4, fixed_abs, tag = 'smem constant byte address 0x4 - core index']
  #allocation1 [shape = 'u32[144,128]{1,0:T(1,128)}', space=vmem, size = 0x12000, scoped, tag = 'internal scratch']
  %s0 = inlined_call_operand.vmem [shape: f32[3,2], index: 0, kind: input, shape index: {}]
  %s1 = inlined_call_operand.vmem [shape: f32[2,3], index: 1, kind: input, shape index: {}]
  %s2 = inlined_call_operand.vmem [shape: f32[2,1], index: 2, kind: input, shape index: {}]
  %s3 = inlined_call_operand.hbm [shape: f32[2,2], index: 3, kind: output, shape index: {}]
  %s4 = sld [smem:[#allocation0]]
  $region22: #{tpu_custom_call.1} parent=0
    _
  %s6 = ssub.s32 1, %s4
  %s7 = scalar_select 0, %s6, %s4
  $region1: #{tpu_custom_call.1} parent=0
    #allocation2 [shape = 'u8[1024]{0}', space=vmem, size = 0x400, scoped, tag = 'output window, operand 0, single buffered']
    #allocation3 [shape = 's32[1]{0}', space=sflag, size = 0x4, scoped, tag = 'scoped memory for tpu_custom_call.1']
    %8 = vsyncpa [#allocation3], 0
    // Predicated region
    $region2: #{tpu_custom_call.1} parent=1 // pred_check
      _
    $region3: #{tpu_custom_call.1} parent=1 // pred_check_branch
      %10 = sbr.rel (0) target = $region5
    $region4: #{tpu_custom_call.1} parent=1 // pred_region
      _
    $region5: #{tpu_custom_call.1} parent=1 // pred_fallthru
      _
    // Predicated region
    $region6: #{tpu_custom_call.1} parent=1 // pred_check
      _
    $region7: #{tpu_custom_call.1} parent=1 // pred_check_branch
      %12 = sbr.rel (0) target = $region9
    $region8: #{tpu_custom_call.1} parent=1 // pred_region
      _
    $region9: #{tpu_custom_call.1} parent=1 // pred_fallthru
      _
    // Predicated region
    $region10: #{tpu_custom_call.1} parent=1 // pred_check
      _
    $region11: #{tpu_custom_call.1} parent=1 // pred_check_branch
      %14 = sbr.rel (0) target = $region13
    $region12: #{tpu_custom_call.1} parent=1 // pred_region
      _
    $region13: #{tpu_custom_call.1} parent=1 // pred_fallthru
      _
    %v15 = vld [vmem:[%s1] sm:$0x3]
    %v16 = vld [vmem:[%s0] sm:$0x7]
    %v17 = vld [vmem:[%s2] sm:$0x3]
    %19 = vset.pattern.permute.xlu0 0
    %20 = vperm.xlu0 %19, %v17
    %v21 = vpop.permute.xlu0 %20
    %vm23 = vcmask 23552
    %v25 = vsel %vm23, %v15, 0
    %vm27 = vcmask 1042432
    %v29 = vsel %vm27, %v16, 0
    %31 = vmatprep.subr.mxu0 0.0
    %32 = vmatpush1.msra.mxu0 0.0
    %33 = vmatprep.subr.mxu0 0.0
    %34 = vmatpush1.msra.mxu0 0.0
    %35 = vmatprep.subr.mxu0 0.0
    %36 = vmatpush1.msra.mxu0 0.0
    %37 = vmatprep.subr.mxu0 0.0
    %38 = vmatpush1.msra.mxu0 0.0
    %39 = vmatprep.subr.mxu0 0.0
    %40 = vmatpush1.msra.mxu0 0.0
    %41 = vmatprep.subr.mxu0 0.0
    %42 = vmatpush1.msra.mxu0 0.0
    %43 = vmatprep.subr.mxu0 0.0
    %44 = vmatpush1.msra.mxu0 0.0
    %45 = vmatprep.subr.mxu0 0.0
    %46 = vmatpush1.msra.mxu0 0.0
    %47 = vmatprep.subr.mxu0 0.0
    %48 = vmatpush1.msra.mxu0 0.0
    %49 = vmatprep.subr.mxu0 0.0
    %50 = vmatpush1.msra.mxu0 0.0
    %51 = vmatprep.subr.mxu0 0.0
    %52 = vmatpush1.msra.mxu0 0.0
    %53 = vmatprep.subr.mxu0 0.0
    %54 = vmatpush1.msra.mxu0 0.0
    %55 = vmatprep.subr.mxu0 0.0
    %56 = vmatpush1.msra.mxu0 0.0
    %57 = vmatprep.subr.mxu0 0.0
    %58 = vmatpush1.msra.mxu0 0.0
    %59 = vmatprep.subr.mxu0 0.0
    %60 = vmatpush1.msra.mxu0 0.0
    %61 = vmatprep.subr.mxu0 0.0
    %62 = vmatpush1.msra.mxu0 %v29
    %63 = vmatprep.subr.mxu0 0.0
    %64 = vmatpush2.msra.mxu0 0.0
    %65 = vmatprep.subr.mxu0 0.0
    %66 = vmatpush2.msra.mxu0 0.0
    %67 = vmatprep.subr.mxu0 0.0
    %68 = vmatpush2.msra.mxu0 0.0
    %69 = vmatprep.subr.mxu0 0.0
    %70 = vmatpush2.msra.mxu0 0.0
    %71 = vmatprep.subr.mxu0 0.0
    %72 = vmatpush2.msra.mxu0 0.0
    %73 = vmatprep.subr.mxu0 0.0
    %74 = vmatpush2.msra.mxu0 0.0
    %75 = vmatprep.subr.mxu0 0.0
    %76 = vmatpush2.msra.mxu0 0.0
    %77 = vmatprep.subr.mxu0 0.0
    %78 = vmatpush2.msra.mxu0 0.0
    %79 = vmatprep.subr.mxu0 0.0
    %80 = vmatpush2.msra.mxu0 0.0
    %81 = vmatprep.subr.mxu0 0.0
    %82 = vmatpush2.msra.mxu0 0.0
    %83 = vmatprep.subr.mxu0 0.0
    %84 = vmatpush2.msra.mxu0 0.0
    %85 = vmatprep.subr.mxu0 0.0
    %86 = vmatpush2.msra.mxu0 0.0
    %87 = vmatprep.subr.mxu0 0.0
    %88 = vmatpush2.msra.mxu0 0.0
    %89 = vmatprep.subr.mxu0 0.0
    %90 = vmatpush2.msra.mxu0 0.0
    %91 = vmatprep.subr.mxu0 0.0
    %92 = vmatpush2.msra.mxu0 0.0
    %93 = vmatprep.subr.mxu0 0.0
    %94 = vmatpush2.msra.mxu0 0.0
    %95 = vmatprep.mubr.f32.mxu0 0.0
    %96 = vmatmul.mubr.f32.gmra.mxu0 %v25
    %v97 = vpop.f32.mrf.mxu0
    %v98 = vadd.f32 %v21, %v97
    %v99 = vpop.f32.mrf.mxu0
    %100 = vdwg.mxu0
    %vm101 = vcmask 9216
    %102 = vst.msk [vmem:[#allocation2] sm:$0x3] %vm101, %v98
    // Predicated region
    $region14: #{tpu_custom_call.1} parent=1 // pred_check
      _
    $region15: #{tpu_custom_call.1} parent=1 // pred_check_branch
      %104 = sbr.rel (0) target = $region17
    $region16: #{tpu_custom_call.1} parent=1 // pred_region
      %s106 = ssub.s32 32, 32
      %107 = vsyncadd [#allocation3], %s106
      %s109 = sshll.u32 [#allocation2], 4
      %s110 = int_to_ptr.vmem [resolvable:$true] %s109
      %112 = dma.vmem_to_hbm [thread:$0]  %s110, 32, %s3, [#allocation3]
    $region17: #{tpu_custom_call.1} parent=1 // pred_fallthru
      _
    // Predicated region
    $region18: #{tpu_custom_call.1} parent=1 // pred_check
      _
    $region19: #{tpu_custom_call.1} parent=1 // pred_check_branch
      %114 = sbr.rel (0) target = $region21
    $region20: #{tpu_custom_call.1} parent=1 // pred_region
      %115 = dma.done [#allocation3], 32
    $region21: #{tpu_custom_call.1} parent=1 // pred_fallthru
      _
    %116 = vsyncpa [#allocation3], 1

</llo_original>
